<compile_context>
chip_gen: v6e
topology: v6e:2x2x1
jax: 0.10.0
libtpu: 0.0.40
codegen_flags: <defaults>
</compile_context>

<pallas_src>
import math

import jax
import jax.numpy as jnp
from jax import lax
from jax.experimental import pallas as pl
from jax.experimental.pallas import tpu as pltpu


def _round_up(x, k):
    return ((x + k - 1) // k) * k


def _vmem_capacity_bytes():
    """Best-effort per-core VMEM capacity; conservative (v7x, 64 MiB) fallback."""
    try:
        info = pltpu.get_tpu_info()
        for attr in ("vmem_capacity_bytes", "vmem_bytes", "vmem_size_bytes"):
            cap = getattr(info, attr, None)
            if cap:
                return int(cap)
    except Exception:
        pass
    return 64 * 1024 * 1024


def _make_aligned_kernel(m, return_grad):
    """m % 128 == 0: dense, 128-aligned half stores into (TN, 2m) output blocks."""

    def kernel(params_ref, x1_ref, x2_ref, *out_refs):
        a = params_ref[0]      # sqrt(5) / l
        sig2 = params_ref[1]   # sigf ** 2
        c1 = params_ref[2]     # 5 * sigf**2 / (3 * l**2)

        diff = x1_ref[...] - x2_ref[...]          # (TN, m), broadcast
        r = jnp.abs(diff) * a                     # |x1 - x2| * sqrt(5)/l  (d == 1)
        exp_r = jnp.exp(-r)
        rp1 = r + 1.0
        rr = r * r
        t = exp_r * c1

        kttau = (exp_r * sig2) * (rr * (1.0 / 3.0) + rp1)   # Matern-5/2 block
        g = diff * rp1 * t                                   # == dkdttau == -dkdf

        feat_ref = out_refs[0]
        feat_ref[:, :m] = kttau.astype(feat_ref.dtype)
        feat_ref[:, m:] = g.astype(feat_ref.dtype)
        if return_grad:
            dfeat_ref = out_refs[1]
            d2 = t * (rp1 - rr)                              # d2k/dt dtau (identity warp)
            dfeat_ref[:, :m] = (-g).astype(dfeat_ref.dtype)
            dfeat_ref[:, m:] = d2.astype(dfeat_ref.dtype)

    return kernel


def _make_select_kernel(m, return_grad):
    """m % 128 != 0 fallback: x2 row duplicated to width 2m; a lane-index select
    builds the [kttau | dkdttau] / [dkdf | d2kdtdtau] layout in one full-block
    store (no post-hoc HBM repack, no unaligned stores)."""

    def kernel(params_ref, x1_ref, x2_ref, *out_refs):
        a = params_ref[0]
        sig2 = params_ref[1]
        c1 = params_ref[2]

        diff = x1_ref[...] - x2_ref[...]          # (TN, 2m); x2 halves identical
        r = jnp.abs(diff) * a
        exp_r = jnp.exp(-r)
        rp1 = r + 1.0
        rr = r * r
        t = exp_r * c1

        kttau = (exp_r * sig2) * (rr * (1.0 / 3.0) + rp1)
        g = diff * rp1 * t

        first_half = lax.broadcasted_iota(jnp.int32, diff.shape, 1) < m
        out_refs[0][...] = jnp.where(first_half, kttau, g).astype(out_refs[0].dtype)
        if return_grad:
            d2 = t * (rp1 - rr)
            out_refs[1][...] = jnp.where(first_half, -g, d2).astype(out_refs[1].dtype)

    return kernel


def matern52_with_gradients(x1, x2, rawlen, rawsigf, return_grad=False,
                            out_dtype=jnp.float32):
    """JAX wrapper reproducing Matern52withGradients.forward with IdentityWarp."""
    x1 = jnp.asarray(x1, jnp.float32)
    x2 = jnp.asarray(x2, jnp.float32)
    if x1.ndim == 1:
        x1 = x1[:, None]
    if x2.ndim == 1:
        x2 = x2[:, None]
    n, d = x1.shape
    m = x2.shape[0]
    assert d == 1 and x2.shape[1] == 1, "module semantics require d == 1 (squeeze(-1))"
    # TODO(synk): non-identity InputWarping modules are not implemented here.

    n_out = 2 if return_grad else 1
    aligned = (m % 128 == 0)
    out_w = 2 * m                        # output row width == torch.cat layout
    x2_w = m if aligned else 2 * m       # width of the resident x2 row block
    w_vmem = _round_up(out_w, 128)       # lanes occupied per output row in VMEM
    comp_w_vmem = _round_up(x2_w, 128)   # lanes of the elementwise compute arrays

    # ---- generation-aware tile / VMEM budgets --------------------------------
    vmem_cap = _vmem_capacity_bytes()
    # v5e/v6e: 128 MiB VMEM -> generous budget; v7x: 64 MiB -> tighter.
    out_budget = (28 << 20) if vmem_cap >= (100 << 20) else (10 << 20)
    # double-buffered outputs + double-buffered (tn,1) x1 tile (lane-padded to
    # 128) + ~6 live f32 elementwise intermediates (spill scratch).
    bytes_per_row = 4 * (n_out * 2 * w_vmem + 2 * 128 + 6 * comp_w_vmem)
    tn_cap = max(8, (out_budget // bytes_per_row) // 8 * 8)
    tn = min(1024, tn_cap, _round_up(n, 8))
    n_pad = _round_up(n, tn)
    # Guarantee >= 2 grid steps so megacore parts (v7x: 2 TCs) can shard the
    # "parallel" axis; on single-TC parts the extra step costs ~0.35 us.
    if n_pad // tn < 2 and tn > 8:
        tn = max(8, _round_up(tn // 2, 8))
        n_pad = _round_up(n, tn)

    # Right-sized scoped-VMEM limit (actual need + headroom), never the whole chip.
    vmem_need = 4 * (n_out * 2 * tn * w_vmem      # double-buffered outputs
                     + 2 * tn * 128               # double-buffered x1 tile
                     + 2 * 8 * comp_w_vmem        # resident x2 row (sublane-padded)
                     + 6 * tn * comp_w_vmem)      # elementwise intermediates
    vmem_limit = max(2 * vmem_need, 16 << 20)
    vmem_limit = min(vmem_limit, vmem_cap * 3 // 4)
    vmem_limit = max(vmem_limit, vmem_need + (4 << 20))

    # ---- scalar prep (get_natural_parameters + constant folding) -------------
    l = jax.nn.softplus(jnp.asarray(rawlen, jnp.float32)).reshape(())
    sigf = jax.nn.softplus(jnp.asarray(rawsigf, jnp.float32)).reshape(())
    a = jnp.float32(math.sqrt(5.0)) / l
    sig2 = sigf * sigf
    c1 = 5.0 * sig2 / (3.0 * l * l)
    params = jnp.stack([a, sig2, c1])             # (3,) f32, lives in SMEM

    # ---- mean centering (glue, matches torch) --------------------------------
    mean = x1.mean(axis=0)
    x1c = x1 - mean                               # (n, 1)
    x2c = (x2 - mean).reshape(1, m)               # (1, m)
    if not aligned:
        x2c = jnp.concatenate([x2c, x2c], axis=1)  # (1, 2m), duplicated halves
    if n_pad != n:
        x1c = jnp.pad(x1c, ((0, n_pad - n), (0, 0)))

    kernel = (_make_aligned_kernel if aligned else _make_select_kernel)(m, return_grad)

    one_shape = jax.ShapeDtypeStruct((n_pad, out_w), out_dtype)
    one_spec = pl.BlockSpec((tn, out_w), lambda i: (i, 0))
    if return_grad:
        out_shape = (one_shape, one_shape)
        out_specs = (one_spec, pl.BlockSpec((tn, out_w), lambda i: (i, 0)))
    else:
        out_shape = one_shape
        out_specs = one_spec

    cost = pl.CostEstimate(
        flops=(10 + 4 * n_out) * n_pad * x2_w,
        transcendentals=n_pad * x2_w,
        bytes_accessed=jnp.dtype(out_dtype).itemsize * n_out * n_pad * out_w
        + 4 * (n_pad + x2_w),
    )

    outs = pl.pallas_call(
        kernel,
        out_shape=out_shape,
        grid=(n_pad // tn,),
        in_specs=[pl.BlockSpec(memory_space=pltpu.MemorySpace.SMEM),   # scalars
                  pl.BlockSpec((tn, 1), lambda i: (i, 0)),             # x1 row tile
                  pl.BlockSpec((1, x2_w), lambda i: (0, 0))],          # x2 row (resident)
        out_specs=out_specs,
        compiler_params=pltpu.CompilerParams(
            dimension_semantics=("parallel",),
            vmem_limit_bytes=int(vmem_limit)),
        cost_estimate=cost,
    )(params, x1c, x2c)

    if return_grad:
        feat, dfeat = outs
        return feat[:n], dfeat[:n]
    return outs[:n]


def _reference(x1, x2, rawlen, rawsigf):
    """Pure-JAX reference mirroring the PyTorch forward (return_grad=True)."""
    l = jax.nn.softplus(rawlen)
    sigf = jax.nn.softplus(rawsigf)
    dx1 = jnp.ones_like(x1)
    dx2 = jnp.ones_like(x2)
    mean = x1.mean(0)
    diff = (x1 - mean)[:, None, :] - (x2 - mean)[None, :, :]
    sqrd = (diff ** 2).sum(-1)
    r = jnp.sqrt(jnp.maximum(sqrd, 1e-30)) * math.sqrt(5.0) / l
    exp_r = jnp.exp(-r)
    quad = r ** 2 / 3.0
    r = r + 1.0
    sig2 = sigf ** 2
    kttau = exp_r * (quad + r) * sig2
    dkdf = diff[..., 0] * r * exp_r * (-5.0 * sig2) / (3.0 * l ** 2)
    dkdttau = -(dkdf.T * dx2).T
    features = jnp.concatenate([kttau, dkdttau], axis=-1)
    dkdttau_g = dkdf * dx1
    d2 = exp_r * (r - 3.0 * quad) * (5.0 * sig2) / (3.0 * l ** 2) * dx1 * dx2.T
    return features, jnp.concatenate([dkdttau_g, d2], axis=-1)


if __name__ == "__main__":
    # Deterministic parameters from reset_parameters(len_init=1.0):
    #   rawlen = inverse_softplus(1.0) = log(e - 1), rawsigf = 0.5413
    rawlen = jnp.float32(math.log(math.e - 1.0))
    rawsigf = jnp.float32(0.5413)

    key = jax.random.PRNGKey(0)
    keys = jax.random.split(key, 8)

    # (n, m): two unaligned-m cases (select path) and one 128-aligned case.
    for idx, (n, m) in enumerate(((16, 16), (20, 40), (40, 128))):
        ka, kb = keys[2 * idx], keys[2 * idx + 1]
        x1 = jax.random.normal(ka, (n, 1), dtype=jnp.float32)
        x2 = jax.random.normal(kb, (m, 1), dtype=jnp.float32)

        feat, dfeat = matern52_with_gradients(x1, x2, rawlen, rawsigf, return_grad=True)
        feat = jax.block_until_ready(feat)
        dfeat = jax.block_until_ready(dfeat)

        ref_feat, ref_dfeat = _reference(x1, x2, rawlen, rawsigf)
        assert feat.shape == (n, 2 * m) and dfeat.shape == (n, 2 * m)
        assert jnp.allclose(feat, ref_feat, rtol=1e-5, atol=1e-5)
        assert jnp.allclose(dfeat, ref_dfeat, rtol=1e-5, atol=1e-5)

    # return_grad=False path: single-output kernel, dfeaturesdt never computed.
    x1 = jax.random.normal(keys[6], (20, 1), dtype=jnp.float32)
    x2 = jax.random.normal(keys[7], (40, 1), dtype=jnp.float32)
    feat_only = jax.block_until_ready(matern52_with_gradients(x1, x2, rawlen, rawsigf))
    ref_feat, _ = _reference(x1, x2, rawlen, rawsigf)
    assert feat_only.shape == (20, 80)
    assert jnp.allclose(feat_only, ref_feat, rtol=1e-5, atol=1e-5)

    print("KERNEL_OK")
</pallas_src>

<mosaic_0001>
module attributes {stable_mosaic.version = 11 : i64} {
  func.func @kernel(%arg0: i32, %arg1: memref<3xf32, #tpu.memory_space<smem>>, %arg2: memref<8x1xf32, #tpu.memory_space<vmem>>, %arg3: memref<1x32xf32, #tpu.memory_space<vmem>>, %arg4: memref<8x32xf32, #tpu.memory_space<vmem>>, %arg5: memref<8x32xf32, #tpu.memory_space<vmem>>) attributes {dimension_semantics = [#tpu.dimension_semantics<parallel>], iteration_bounds = array<i64: 2>, scalar_prefetch = 0 : i64, scratch_operands = 0 : i64, tpu.core_type = #tpu.core_type<tc>, window_params = [{transform_indices = @transform_0, window_bounds = array<i64: 3>}, {transform_indices = @transform_1, window_bounds = array<i64: 8, 1>}, {pipeline_mode = #tpu.pipeline_mode<synchronous>, transform_indices = @transform_2, window_bounds = array<i64: 1, 32>}, {transform_indices = @transform_3, window_bounds = array<i64: 8, 32>}, {transform_indices = @transform_4, window_bounds = array<i64: 8, 32>}]} {
    %c0 = arith.constant 0 : index
    %0 = memref.load %arg1[%c0] : memref<3xf32, #tpu.memory_space<smem>>
    %c1 = arith.constant 1 : index
    %1 = memref.load %arg1[%c1] : memref<3xf32, #tpu.memory_space<smem>>
    %c2 = arith.constant 2 : index
    %2 = memref.load %arg1[%c2] : memref<3xf32, #tpu.memory_space<smem>>
    %c0_0 = arith.constant 0 : index
    %c0_1 = arith.constant 0 : index
    %3 = vector.load %arg2[%c0_0, %c0_1] : memref<8x1xf32, #tpu.memory_space<vmem>>, vector<8x1xf32>
    %c0_2 = arith.constant 0 : index
    %c0_3 = arith.constant 0 : index
    %4 = vector.load %arg3[%c0_2, %c0_3] : memref<1x32xf32, #tpu.memory_space<vmem>>, vector<1x32xf32>
    %5 = vector.broadcast %3 : vector<8x1xf32> to vector<8x32xf32>
    %6 = vector.broadcast %4 : vector<1x32xf32> to vector<8x32xf32>
    %7 = arith.subf %5, %6 : vector<8x32xf32>
    %8 = math.absf %7 : vector<8x32xf32>
    %9 = vector.broadcast %0 : f32 to vector<8x32xf32>
    %10 = arith.mulf %8, %9 : vector<8x32xf32>
    %cst = arith.constant 0.000000e+00 : f32
    %11 = vector.broadcast %cst : f32 to vector<8x32xf32>
    %12 = arith.subf %11, %10 : vector<8x32xf32>
    %13 = math.exp %12 : vector<8x32xf32>
    %cst_4 = arith.constant 1.000000e+00 : f32
    %14 = vector.broadcast %cst_4 : f32 to vector<8x32xf32>
    %15 = arith.addf %10, %14 : vector<8x32xf32>
    %16 = arith.mulf %10, %10 : vector<8x32xf32>
    %17 = vector.broadcast %2 : f32 to vector<8x32xf32>
    %18 = arith.mulf %13, %17 : vector<8x32xf32>
    %19 = vector.broadcast %1 : f32 to vector<8x32xf32>
    %20 = arith.mulf %13, %19 : vector<8x32xf32>
    %cst_5 = arith.constant 0.333333343 : f32
    %21 = vector.broadcast %cst_5 : f32 to vector<8x32xf32>
    %22 = arith.mulf %16, %21 : vector<8x32xf32>
    %23 = arith.addf %22, %15 : vector<8x32xf32>
    %24 = arith.mulf %20, %23 : vector<8x32xf32>
    %25 = arith.mulf %7, %15 : vector<8x32xf32>
    %26 = arith.mulf %25, %18 : vector<8x32xf32>
    %27 = tpu.iota {dimensions = array<i32: 1>} : vector<8x32xi32>
    %c16_i32 = arith.constant 16 : i32
    %28 = vector.broadcast %c16_i32 : i32 to vector<8x32xi32>
    %29 = arith.cmpi slt, %27, %28 : vector<8x32xi32>
    %30 = arith.select %29, %24, %26 : vector<8x32xi1>, vector<8x32xf32>
    %c0_6 = arith.constant 0 : index
    %c0_7 = arith.constant 0 : index
    %31 = vector.load %arg4[%c0_6, %c0_7] : memref<8x32xf32, #tpu.memory_space<vmem>>, vector<8x32xf32>
    tpu.vector_store %arg4[%c0_6, %c0_7], %30 {strides = array<i32>} : memref<8x32xf32, #tpu.memory_space<vmem>>, vector<8x32xf32>,
    %32 = arith.subf %15, %16 : vector<8x32xf32>
    %33 = arith.mulf %18, %32 : vector<8x32xf32>
    %cst_8 = arith.constant 0.000000e+00 : f32
    %34 = vector.broadcast %cst_8 : f32 to vector<8x32xf32>
    %35 = arith.subf %34, %26 : vector<8x32xf32>
    %36 = arith.select %29, %35, %33 : vector<8x32xi1>, vector<8x32xf32>
    %c0_9 = arith.constant 0 : index
    %c0_10 = arith.constant 0 : index
    %37 = vector.load %arg5[%c0_9, %c0_10] : memref<8x32xf32, #tpu.memory_space<vmem>>, vector<8x32xf32>
    tpu.vector_store %arg5[%c0_9, %c0_10], %36 {strides = array<i32>} : memref<8x32xf32, #tpu.memory_space<vmem>>, vector<8x32xf32>,
    return
  }
  func.func @transform_0(%arg0: i32) -> i32 {
    %c0_i32 = arith.constant 0 : i32
    %c0_i32_0 = arith.constant 0 : i32
    return %c0_i32 : i32
  }
  func.func @transform_1(%arg0: i32) -> (i32, i32) {
    %c0_i32 = arith.constant 0 : i32
    %c0_i32_0 = arith.constant 0 : i32
    return %arg0, %c0_i32 : i32, i32
  }
  func.func @transform_2(%arg0: i32) -> (i32, i32) {
    %c0_i32 = arith.constant 0 : i32
    %c0_i32_0 = arith.constant 0 : i32
    %c0_i32_1 = arith.constant 0 : i32
    return %c0_i32, %c0_i32_0 : i32, i32
  }
  func.func @transform_3(%arg0: i32) -> (i32, i32) {
    %c0_i32 = arith.constant 0 : i32
    %c0_i32_0 = arith.constant 0 : i32
    return %arg0, %c0_i32 : i32, i32
  }
  func.func @transform_4(%arg0: i32) -> (i32, i32) {
    %c0_i32 = arith.constant 0 : i32
    %c0_i32_0 = arith.constant 0 : i32
    return %arg0, %c0_i32 : i32, i32
  }
}

</mosaic_0001>

<llo_original>
// kernel: tpu_custom_call.1
$region0: #{tpu_custom_call.1}
  #allocation0 [shape = 'u32[]', space=smem, size = 0x4, offset = 0x4, fixed_abs, tag = 'smem constant byte address 0x4 - core index']
  #allocation1 [shape = 'u32[144,128]{1,0:T(1,128)}', space=vmem, size = 0x12000, scoped, tag = 'internal scratch']
  %s0 = inlined_call_operand.vmem [shape: f32[3], index: 0, kind: input, shape index: {}]
  %s1 = inlined_call_operand.vmem [shape: f32[16,1], index: 1, kind: input, shape index: {}]
  %s2 = inlined_call_operand.vmem [shape: f32[1,32], index: 2, kind: input, shape index: {}]
  %s3 = inlined_call_operand.hbm [shape: f32[16,32], index: 3, kind: output, shape index: {0}]
  %s4 = inlined_call_operand.hbm [shape: f32[16,32], index: 4, kind: output, shape index: {1}]
  %5 = xla_tuple %s3, %s4
  %s6 = sld [smem:[#allocation0]]
  $region57: #{tpu_custom_call.1} parent=0
    _
  %s8 = ssub.s32 1, %s6
  %s9 = scalar_select 0, %s8, %s6
  $region1: #{tpu_custom_call.1} parent=0
    #allocation2 [shape = 'u8[512]{0}', space=smem, size = 0x200, scoped, tag = 'input window, operand 0, single buffered']
    #allocation3 [shape = 's32[2]{0}', space=sflag, size = 0x8, scoped, tag = 'scoped memory for tpu_custom_call.1']
    #allocation4 [shape = 's32[2]{0}', space=sflag, size = 0x8, scoped, tag = 'scoped memory for tpu_custom_call.1']
    #allocation5 [shape = 'u8[8192]{0}', space=vmem, size = 0x2000, scoped, tag = 'output window, operand 0']
    #allocation6 [shape = 'u8[8192]{0}', space=vmem, size = 0x2000, scoped, tag = 'output window, operand 1']
    #allocation7 [shape = 's32[2]{0}', space=sflag, size = 0x8, scoped, tag = 'scoped memory for tpu_custom_call.1']
    %10 = vsyncpa [#allocation4], 0
    %11 = vsyncpa [#allocation3], 0
    %s12 = scalar_lea.sflag [#allocation3], 1
    %13 = vsyncpa %s12, 0
    %14 = vsyncpa [#allocation7], 0
    %s15 = scalar_lea.sflag [#allocation7], 1
    %16 = vsyncpa %s15, 0
    loop: start=0, step=1, limit=4
    $region2: #{tpu_custom_call.1} parent=1 // loop_pre_header
      _
    $region3: #{tpu_custom_call.1} parent=1 // loop_header
      %s18 = sphi 0, %s22
      %p19 = scmp.ge.s32.totalorder %s18, 4
      %s26 = sphi 0, %s26
      %s28 = sphi 0, %s26
      %s29 = sphi 0, %s28
      %s43 = sphi 0, %s29
      %s49 = sphi 0, %s51
      %s52 = sphi 0, %s49
      %s53 = sphi 0, %s52
      %s69 = sphi 0, %s53
      %s73 = sphi 0, %s73
      %s75 = sphi 0, %s73
      %s76 = sphi 0, %s75
      %s90 = sphi 0, %s76
      %s96 = sphi 0, %s98
      %s99 = sphi 0, %s96
      %s100 = sphi 0, %s99
      %s116 = sphi 0, %s100
      %s122 = sphi 0, %s124
      %s125 = sphi 0, %s122
      %s126 = sphi 0, %s125
      %s142 = sphi 0, %s126
    $region4: #{tpu_custom_call.1} parent=1 // loop_header_branch
      %21 = sbr.rel (%p19) target = $region8
    $region5: #{tpu_custom_call.1} parent=1 // loop_body
      %s23 = ssub.s32 %s18, 1
      %s24 = ssub.s32 %s18, 2
      %s25 = sadd.s32 %s18, 1
      %s27 = sadd.s32 %s26, 1
      %p30 = scmp.eq.s32.totalorder %s18, 1
      %p31 = scmp.ne.s32.totalorder %s26, %s28
      %p32 = scmp.eq.s32.totalorder %s18, 0
      %p33 = por %p31, %p32
      %p34 = scmp.ne.s32.totalorder %s26, %s28
      %p35 = scmp.eq.s32.totalorder %s23, 1
      %p36 = por %p34, %p35
      %p37 = scmp.ne.s32.totalorder %s28, %s29
      %p38 = scmp.eq.s32.totalorder %s23, 0
      %p39 = por %p37, %p38
      %p40 = scmp.ne.s32.totalorder %s28, %s29
      %p41 = scmp.eq.s32.totalorder %s24, 1
      %p42 = por %p40, %p41
      %p44 = scmp.ne.s32.totalorder %s29, %s43
      %p45 = scmp.eq.s32.totalorder %s24, 0
      %p46 = por %p44, %p45
      %s47 = ssub.s32 %s18, %s25
      %p48 = scmp.eq.s32.totalorder %s47, 0
      %s50 = sadd.s32 %s49, 1
      %s51 = scalar_select %p48, %s49, %s50
      %p54 = pneg %p48
      %p55 = scmp.eq.s32.totalorder %s18, 1
      %p56 = por %p54, %p55
      %p57 = scmp.ne.s32.totalorder %s49, %s52
      %p58 = scmp.eq.s32.totalorder %s18, 0
      %p59 = por %p57, %p58
      %p60 = scmp.ne.s32.totalorder %s49, %s52
      %p61 = scmp.eq.s32.totalorder %s23, 1
      %p62 = por %p60, %p61
      %p63 = scmp.ne.s32.totalorder %s52, %s53
      %p64 = scmp.eq.s32.totalorder %s23, 0
      %p65 = por %p63, %p64
      %p66 = scmp.ne.s32.totalorder %s52, %s53
      %p67 = scmp.eq.s32.totalorder %s24, 1
      %p68 = por %p66, %p67
      %p70 = scmp.ne.s32.totalorder %s53, %s69
      %p71 = scmp.eq.s32.totalorder %s24, 0
      %p72 = por %p70, %p71
      %s74 = sadd.s32 %s73, 1
      %p77 = scmp.eq.s32.totalorder %s18, 1
      %p78 = scmp.ne.s32.totalorder %s73, %s75
      %p79 = scmp.eq.s32.totalorder %s18, 0
      %p80 = por %p78, %p79
      %p81 = scmp.ne.s32.totalorder %s73, %s75
      %p82 = scmp.eq.s32.totalorder %s23, 1
      %p83 = por %p81, %p82
      %p84 = scmp.ne.s32.totalorder %s75, %s76
      %p85 = scmp.eq.s32.totalorder %s23, 0
      %p86 = por %p84, %p85
      %p87 = scmp.ne.s32.totalorder %s75, %s76
      %p88 = scmp.eq.s32.totalorder %s24, 1
      %p89 = por %p87, %p88
      %p91 = scmp.ne.s32.totalorder %s76, %s90
      %p92 = scmp.eq.s32.totalorder %s24, 0
      %p93 = por %p91, %p92
      %s94 = ssub.s32 %s18, %s25
      %p95 = scmp.eq.s32.totalorder %s94, 0
      %s97 = sadd.s32 %s96, 1
      %s98 = scalar_select %p95, %s96, %s97
      %p101 = pneg %p95
      %p102 = scmp.eq.s32.totalorder %s18, 1
      %p103 = por %p101, %p102
      %p104 = scmp.ne.s32.totalorder %s96, %s99
      %p105 = scmp.eq.s32.totalorder %s18, 0
      %p106 = por %p104, %p105
      %p107 = scmp.ne.s32.totalorder %s96, %s99
      %p108 = scmp.eq.s32.totalorder %s23, 1
      %p109 = por %p107, %p108
      %p110 = scmp.ne.s32.totalorder %s99, %s100
      %p111 = scmp.eq.s32.totalorder %s23, 0
      %p112 = por %p110, %p111
      %p113 = scmp.ne.s32.totalorder %s99, %s100
      %p114 = scmp.eq.s32.totalorder %s24, 1
      %p115 = por %p113, %p114
      %p117 = scmp.ne.s32.totalorder %s100, %s116
      %p118 = scmp.eq.s32.totalorder %s24, 0
      %p119 = por %p117, %p118
      %s120 = ssub.s32 %s18, %s25
      %p121 = scmp.eq.s32.totalorder %s120, 0
      %s123 = sadd.s32 %s122, 1
      %s124 = scalar_select %p121, %s122, %s123
      %p127 = pneg %p121
      %p128 = scmp.eq.s32.totalorder %s18, 1
      %p129 = por %p127, %p128
      %p130 = scmp.ne.s32.totalorder %s122, %s125
      %p131 = scmp.eq.s32.totalorder %s18, 0
      %p132 = por %p130, %p131
      %p133 = scmp.ne.s32.totalorder %s122, %s125
      %p134 = scmp.eq.s32.totalorder %s23, 1
      %p135 = por %p133, %p134
      %p136 = scmp.ne.s32.totalorder %s125, %s126
      %p137 = scmp.eq.s32.totalorder %s23, 0
      %p138 = por %p136, %p137
      %p139 = scmp.ne.s32.totalorder %s125, %s126
      %p140 = scmp.eq.s32.totalorder %s24, 1
      %p141 = por %p139, %p140
      %p143 = scmp.ne.s32.totalorder %s126, %s142
      %p144 = scmp.eq.s32.totalorder %s24, 0
      %p145 = por %p143, %p144
      %p146 = scmp.le.s32.totalorder 1, %s18
      %p147 = scmp.lt.s32.totalorder %s18, 3
      %p148 = pnand %p146, %p147
      %p149 = pneg %p148
      // Predicated region
      $region9: #{tpu_custom_call.1} parent=5 // pred_check
        _
      $region10: #{tpu_custom_call.1} parent=5 // pred_check_branch
        %151 = sbr.rel (%p148) target = $region12
      $region11: #{tpu_custom_call.1} parent=5 // pred_region
        %s152 = ssub.s32 %s18, 1
        // Predicated region
        $region13: #{tpu_custom_call.1} parent=11 // pred_check
          %p153 = pneg %p39
        $region14: #{tpu_custom_call.1} parent=11 // pred_check_branch
          %155 = sbr.rel (%p153) target = $region16
        $region15: #{tpu_custom_call.1} parent=11 // pred_region
          %s157 = ssub.s32 16, 16
          %158 = vsyncadd [#allocation4], %s157
          %s160 = sshll.u32 %s0, 4
          %s161 = int_to_ptr.vmem [resolvable:$true] %s160
          %163 = dma.vmem_to_smem %s161, 16, [#allocation2], [#allocation4]
        $region16: #{tpu_custom_call.1} parent=11 // pred_fallthru
          _
        // Predicated region
        $region17: #{tpu_custom_call.1} parent=11 // pred_check
          %p164 = pneg %p86
        $region18: #{tpu_custom_call.1} parent=11 // pred_check_branch
          %166 = sbr.rel (%p164) target = $region20
        $region19: #{tpu_custom_call.1} parent=11 // pred_region
          _
        $region20: #{tpu_custom_call.1} parent=11 // pred_fallthru
          _
      $region12: #{tpu_custom_call.1} parent=5 // pred_fallthru
        _
      %p167 = scmp.lt.s32.totalorder %s18, 2
      // Predicated region
      $region21: #{tpu_custom_call.1} parent=5 // pred_check
        %p168 = pneg %p167
      $region22: #{tpu_custom_call.1} parent=5 // pred_check_branch
        %170 = sbr.rel (%p168) target = $region24
      $region23: #{tpu_custom_call.1} parent=5 // pred_region
        // Predicated region
        $region25: #{tpu_custom_call.1} parent=23 // pred_check
          %p171 = pneg %p59
        $region26: #{tpu_custom_call.1} parent=23 // pred_check_branch
          %173 = sbr.rel (%p171) target = $region28
        $region27: #{tpu_custom_call.1} parent=23 // pred_region
          %p174 = scmp.lt.s32.totalorder %s18, 1
          %s175 = scalar_select %p174, %s18, 1
          %s176 = smul.addr %s175, 8
          %s177 = scalar_lea.vmem %s1, %s176
        $region28: #{tpu_custom_call.1} parent=23 // pred_fallthru
          _
      $region24: #{tpu_custom_call.1} parent=5 // pred_fallthru
        _
      %p178 = scmp.le.s32.totalorder 1, %s18
      %p179 = scmp.lt.s32.totalorder %s18, 3
      %p180 = pnand %p178, %p179
      %p181 = pneg %p180
      // Predicated region
      $region29: #{tpu_custom_call.1} parent=5 // pred_check
        _
      $region30: #{tpu_custom_call.1} parent=5 // pred_check_branch
        %183 = sbr.rel (%p180) target = $region32
      $region31: #{tpu_custom_call.1} parent=5 // pred_region
        %s184 = ssub.s32 %s18, 1
        // Predicated region
        $region33: #{tpu_custom_call.1} parent=31 // pred_check
          %p185 = pneg %p39
        $region34: #{tpu_custom_call.1} parent=31 // pred_check_branch
          %187 = sbr.rel (%p185) target = $region36
        $region35: #{tpu_custom_call.1} parent=31 // pred_region
          %188 = dma.done [#allocation4], 16
        $region36: #{tpu_custom_call.1} parent=31 // pred_fallthru
          _
        %189 = sfence
        %p190 = pneg %p39
        %p191 = pneg %p36
        %p192 = scmp.lt.s32.totalorder %s23, 1
        %s193 = scalar_select %p192, %s23, 1
        %s194 = smul.addr %s193, 8
        %s195 = scalar_lea.vmem %s1, %s194
        %p196 = pneg %p65
        %p197 = pneg %p62
        %p198 = pneg %p86
        %p199 = pneg %p83
        %p200 = pneg %p112
        %p201 = pneg %p109
        %s202 = sand.u32 %s99, 1
        %s203 = scalar_lea.sflag [#allocation3], %s202
        %s204 = sand.u32 %s99, 1
        %s205 = smul.addr %s204, 8
        %s206 = scalar_lea.vmem [#allocation5], %s205
        %p207 = pneg %p138
        %p208 = pneg %p135
        %s209 = sand.u32 %s125, 1
        %s210 = scalar_lea.sflag [#allocation7], %s209
        %s211 = sand.u32 %s125, 1
        %s212 = smul.addr %s211, 8
        %s213 = scalar_lea.vmem [#allocation6], %s212
        %p214 = scmp.lt.s32.totalorder %s23, 1
        %s215 = scalar_select %p214, %s23, 1
        %s216 = smul.addr %s215, 8
        %s217 = scalar_lea.vmem %s1, %s216
        %s218 = sld [smem:[#allocation2]]
        %s219 = sld [smem:[#allocation2 + $0x1]]
        %s220 = sld [smem:[#allocation2 + $0x2]]
        %v221 = vld [vmem:[%s217] sm:$0xff]
        %v222 = vld [vmem:[%s2] sm:$0x1]
        %224 = vset.pattern.permute.xlu0 0
        %225 = vperm.xlu0 %224, %v221
        %v226 = vpop.permute.xlu0 %225
        %v229 = vlaneseq
        %v230 = vshrl.u32 %v229, 7
        %v231 = vsub.s32 0, %v230
        %v232 = vrot.slane %v222, %v231
        %v234 = vsub.f32 %v226, %v232
        %v235 = vand.u32 2147483647, %v234
        %v236 = vstv %s218
        %v237 = vmul.f32 %v235, %v236
        %v238 = vsub.f32 0.0, %v237
        %v239 = vmul.f32 %v238, 1.442695
        %v240 = vpow.pop %v239
        %v241 = vadd.f32 %v237, 1.0
        %v242 = vmul.f32 %v237, %v237
        %v243 = vstv %s220
        %v244 = vmul.f32 %v240, %v243
        %v245 = vstv %s219
        %v246 = vmul.f32 %v240, %v245
        %v247 = vmul.f32 %v242, 0.33333334
        %v248 = vadd.f32 %v247, %v241
        %v249 = vmul.f32 %v246, %v248
        %v250 = vmul.f32 %v234, %v241
        %v251 = vmul.f32 %v250, %v244
        %v252 = vlaneseq
        %v253 = vand.u32 %v252, 127
        %vm254 = vcmp.lt.s32.totalorder %v253, 16
        %v255 = vsel %vm254, %v249, %v251
        %vm256 = vcmask 261120
        %257 = vst.msk [vmem:[%s206] sm:$0xff] %vm256, %v255
        %v258 = vsub.f32 %v241, %v242
        %v259 = vmul.f32 %v244, %v258
        %v260 = vsub.f32 0.0, %v251
        %v261 = vsel %vm254, %v260, %v259
        %262 = vst.msk [vmem:[%s213] sm:$0xff] %vm256, %v261
        %s263 = sand.u32 %s99, 1
        %s264 = scalar_lea.sflag [#allocation3], %s263
        %s265 = sand.u32 %s99, 1
        %s266 = smul.addr %s265, 8
        %s267 = scalar_lea.vmem [#allocation5], %s266
        %s268 = sand.u32 %s125, 1
        %s269 = scalar_lea.sflag [#allocation7], %s268
        %s270 = sand.u32 %s125, 1
        %s271 = smul.addr %s270, 8
        %s272 = scalar_lea.vmem [#allocation6], %s271
        // Predicated region
        $region37: #{tpu_custom_call.1} parent=31 // pred_check
          %p273 = pneg %p109
        $region38: #{tpu_custom_call.1} parent=31 // pred_check_branch
          %275 = sbr.rel (%p273) target = $region40
        $region39: #{tpu_custom_call.1} parent=31 // pred_region
          %s277 = ssub.s32 128, 128
          %278 = vsyncadd %s264, %s277
          %s279 = smul.addr %s23, 128
          %s280 = scalar_lea.hbm %s3, %s279
          %s282 = sshll.u32 %s267, 4
          %s283 = int_to_ptr.vmem [resolvable:$true] %s282
          %285 = dma.vmem_to_hbm [thread:$0]  %s283, 128, %s280, %s264
        $region40: #{tpu_custom_call.1} parent=31 // pred_fallthru
          _
        // Predicated region
        $region41: #{tpu_custom_call.1} parent=31 // pred_check
          %p286 = pneg %p135
        $region42: #{tpu_custom_call.1} parent=31 // pred_check_branch
          %288 = sbr.rel (%p286) target = $region44
        $region43: #{tpu_custom_call.1} parent=31 // pred_region
          %s290 = ssub.s32 128, 128
          %291 = vsyncadd %s269, %s290
          %s292 = smul.addr %s23, 128
          %s293 = scalar_lea.hbm %s4, %s292
          %s295 = sshll.u32 %s272, 4
          %s296 = int_to_ptr.vmem [resolvable:$true] %s295
          %298 = dma.vmem_to_hbm [thread:$0]  %s296, 128, %s293, %s269
        $region44: #{tpu_custom_call.1} parent=31 // pred_fallthru
          _
      $region32: #{tpu_custom_call.1} parent=5 // pred_fallthru
        _
      %p299 = scmp.le.s32.totalorder 2, %s18
      // Predicated region
      $region45: #{tpu_custom_call.1} parent=5 // pred_check
        %p300 = pneg %p299
      $region46: #{tpu_custom_call.1} parent=5 // pred_check_branch
        %302 = sbr.rel (%p300) target = $region48
      $region47: #{tpu_custom_call.1} parent=5 // pred_region
        %s303 = ssub.s32 %s18, 2
        // Predicated region
        $region49: #{tpu_custom_call.1} parent=47 // pred_check
          %p304 = pneg %p115
        $region50: #{tpu_custom_call.1} parent=47 // pred_check_branch
          %306 = sbr.rel (%p304) target = $region52
        $region51: #{tpu_custom_call.1} parent=47 // pred_region
          %s307 = sand.u32 %s100, 1
          %s308 = scalar_lea.sflag [#allocation3], %s307
          %s309 = sand.u32 %s100, 1
          %s310 = smul.addr %s309, 8
          %s311 = scalar_lea.vmem [#allocation5], %s310
          %312 = dma.done %s308, 128
        $region52: #{tpu_custom_call.1} parent=47 // pred_fallthru
          _
        // Predicated region
        $region53: #{tpu_custom_call.1} parent=47 // pred_check
          %p313 = pneg %p141
        $region54: #{tpu_custom_call.1} parent=47 // pred_check_branch
          %315 = sbr.rel (%p313) target = $region56
        $region55: #{tpu_custom_call.1} parent=47 // pred_region
          %s316 = sand.u32 %s126, 1
          %s317 = scalar_lea.sflag [#allocation7], %s316
          %s318 = sand.u32 %s126, 1
          %s319 = smul.addr %s318, 8
          %s320 = scalar_lea.vmem [#allocation6], %s319
          %321 = dma.done %s317, 128
        $region56: #{tpu_custom_call.1} parent=47 // pred_fallthru
          _
      $region48: #{tpu_custom_call.1} parent=5 // pred_fallthru
        _
    $region6: #{tpu_custom_call.1} parent=1 // loop_footer
      %s22 = sadd.s32 1, %s18
    $region7: #{tpu_custom_call.1} parent=1 // loop_footer_branch
      %17 = sbr.rel target = $region3
    $region8: #{tpu_custom_call.1} parent=1 // loop_exit
      _
    %322 = vsyncpa [#allocation3], 1
    %s323 = scalar_lea.sflag [#allocation3], 1
    %324 = vsyncpa %s323, 1
    %325 = vsyncpa [#allocation7], 1
    %s326 = scalar_lea.sflag [#allocation7], 1
    %327 = vsyncpa %s326, 1
    %328 = vsyncpa [#allocation4], 1
    %s329 = scalar_lea.sflag [#allocation4], 1
    %330 = vsyncpa %s329, 1

</llo_original>
